<compile_context>
chip_gen: v7x
topology: tpu7x:2x2x1
jax: 0.10.0
libtpu: 0.0.40
codegen_flags: <defaults>
</compile_context>

<pallas_src>
import jax
import jax.numpy as jnp
from jax.experimental import pallas as pl
from jax.experimental.pallas import tpu as pltpu

IN_FEATURES = 28 * 28      # 784
N_HIDDEN = 32              # n_hidden_neurons (small synthetic size)
N_OUT = 10

OUT_PAD = 128              # lane-dense output slab; real logits are [:, :10]
TB_CAP = 2048              # batch-tile cap (fits 32 MiB VMEM double-buffered)


def _round_up(n, m):
    return ((n + m - 1) // m) * m


# ----------------------------------------------------------------------------
# Kernel
# ----------------------------------------------------------------------------
def mlp_kernel(x_ref, w1_ref, b1_ref, w2_ref, b2_ref, o_ref):
    # x arrives in its HBM dtype (f32 or bf16); cast in VMEM (free vs an extra
    # HBM pad/cast pass in the wrapper).
    x = x_ref[...].astype(jnp.bfloat16)
    # fc1: (tb, 784)bf16 @ (784, H)bf16 -> f32 accumulation on the MXU.
    h = jnp.dot(x, w1_ref[...], preferred_element_type=jnp.float32)
    # bias + sigmoid in f32 (VPU/EUP).
    h = jax.nn.sigmoid(h + b1_ref[...])
    # fc2: bf16 inputs, f32 accumulation; tiny (H=32 -> 128 padded lanes).
    out = jnp.dot(h.astype(jnp.bfloat16), w2_ref[...],
                  preferred_element_type=jnp.float32)
    o_ref[...] = (out + b2_ref[...]).astype(o_ref.dtype)


# ----------------------------------------------------------------------------
# Parameter packing (done ONCE at model setup, not per forward call)
# ----------------------------------------------------------------------------
def pack_params(w1, b1, w2, b2):
    """w1: (784, H); b1: (H,); w2: (H, 10); b2: (10,).

    Weights are in (in, out) layout, i.e. transposed relative to
    torch.nn.Linear.weight.  Returns pre-padded / pre-casted device arrays.
    """
    H = w1.shape[1]
    w1_p = w1.astype(jnp.bfloat16)                                   # (784, H)
    b1_p = b1.reshape(1, H).astype(jnp.float32)                      # (1, H)
    w2_p = jnp.pad(w2.astype(jnp.bfloat16),
                   ((0, 0), (0, OUT_PAD - N_OUT)))                   # (H, 128)
    b2_p = jnp.pad(b2.astype(jnp.float32),
                   (0, OUT_PAD - N_OUT)).reshape(1, OUT_PAD)         # (1, 128)
    return w1_p, b1_p, w2_p, b2_p


def _choose_tiling(B):
    """Batch tile + padded batch.  tb is a multiple of 16 (bf16 sublane
    packing), capped at TB_CAP; when more than one grid step is needed the
    step count is kept even so v7x's two TensorCores get balanced work."""
    tb = min(_round_up(B, 16), TB_CAP)
    steps = pl.cdiv(B, tb)
    if steps > 1:
        steps = _round_up(steps, 2)                  # even split across 2 TCs
        tb = min(_round_up(pl.cdiv(B, steps), 16), TB_CAP)
    b_pad = steps * tb
    return tb, b_pad


# ----------------------------------------------------------------------------
# Forward
# ----------------------------------------------------------------------------
def mnist_net_forward(x, packed_params, *, tb=None):
    """x: (B, 784) f32 or bf16; packed_params: output of pack_params.

    Returns (B, 10) bf16 logits (matmuls already run in bf16, so no extra
    precision is lost by storing bf16).
    """
    w1_p, b1_p, w2_p, b2_p = packed_params
    B = x.shape[0]
    H = w1_p.shape[1]

    if tb is None:
        tb, b_pad = _choose_tiling(B)
    else:
        tb = max(16, _round_up(tb, 16))
        b_pad = _round_up(B, tb)

    # Only batch-dim zero padding (cheap, only when B % tb != 0); no K padding
    # and no dtype conversion pass on the dominant x stream.
    if b_pad != B:
        x = jnp.pad(x, ((0, b_pad - B), (0, 0)))

    out_padded = pl.pallas_call(
        mlp_kernel,
        out_shape=jax.ShapeDtypeStruct((b_pad, OUT_PAD), jnp.bfloat16),
        grid_spec=pltpu.PrefetchScalarGridSpec(
            num_scalar_prefetch=0,
            grid=(b_pad // tb,),
            in_specs=[
                pl.BlockSpec((tb, IN_FEATURES), lambda i: (i, 0)),   # x (streamed)
                pl.BlockSpec((IN_FEATURES, H), lambda i: (0, 0)),    # W1 (resident)
                pl.BlockSpec((1, H), lambda i: (0, 0)),              # b1 (resident)
                pl.BlockSpec((H, OUT_PAD), lambda i: (0, 0)),        # W2 (resident)
                pl.BlockSpec((1, OUT_PAD), lambda i: (0, 0)),        # b2 (resident)
            ],
            out_specs=pl.BlockSpec((tb, OUT_PAD), lambda i: (i, 0)),
        ),
        compiler_params=pltpu.CompilerParams(
            dimension_semantics=("parallel",),
            vmem_limit_bytes=32 << 20,
        ),
    )(x, w1_p, b1_p, w2_p, b2_p)

    # Slice off batch padding and lane padding.  Downstream kernels that can
    # consume the padded (b_pad, 128) slab directly should do so and skip this.
    return out_padded[:B, :N_OUT]


def _reference(x, w1, b1, w2, b2):
    h = jax.nn.sigmoid(x @ w1 + b1)
    return h @ w2 + b2


if __name__ == "__main__":
    key = jax.random.PRNGKey(0)
    kx, kw1, kb1, kw2, kb2 = jax.random.split(key, 5)

    B = 8  # small test batch
    x = jax.random.normal(kx, (B, IN_FEATURES), dtype=jnp.float32)

    # Deterministic parameter init (PyTorch-Linear-style uniform bounds),
    # stored in (in, out) layout.
    bound1 = 1.0 / (IN_FEATURES ** 0.5)
    w1 = jax.random.uniform(kw1, (IN_FEATURES, N_HIDDEN),
                            minval=-bound1, maxval=bound1, dtype=jnp.float32)
    b1 = jax.random.uniform(kb1, (N_HIDDEN,),
                            minval=-bound1, maxval=bound1, dtype=jnp.float32)
    bound2 = 1.0 / (N_HIDDEN ** 0.5)
    w2 = jax.random.uniform(kw2, (N_HIDDEN, N_OUT),
                            minval=-bound2, maxval=bound2, dtype=jnp.float32)
    b2 = jax.random.uniform(kb2, (N_OUT,),
                            minval=-bound2, maxval=bound2, dtype=jnp.float32)

    # Pack weights once (outside the per-call path).
    params = pack_params(w1, b1, w2, b2)

    out = mnist_net_forward(x, params)
    out = jax.block_until_ready(out)

    ref = _reference(x, w1, b1, w2, b2)
    assert out.shape == (B, N_OUT)
    # bf16 matmul inputs + bf16 output -> looser tolerance than pure f32.
    assert jnp.allclose(out.astype(jnp.float32), ref, atol=2e-2, rtol=2e-2)

    print("KERNEL_OK")
</pallas_src>

<mosaic_0001>
module attributes {stable_mosaic.version = 11 : i64} {
  func.func @mlp_kernel(%arg0: i32, %arg1: memref<16x784xf32, #tpu.memory_space<vmem>>, %arg2: memref<784x32xbf16, #tpu.memory_space<vmem>>, %arg3: memref<1x32xf32, #tpu.memory_space<vmem>>, %arg4: memref<32x128xbf16, #tpu.memory_space<vmem>>, %arg5: memref<1x128xf32, #tpu.memory_space<vmem>>, %arg6: memref<16x128xbf16, #tpu.memory_space<vmem>>) attributes {dimension_semantics = [#tpu.dimension_semantics<parallel>], iteration_bounds = array<i64: 1>, scalar_prefetch = 0 : i64, scratch_operands = 0 : i64, tpu.core_type = #tpu.core_type<tc>, window_params = [{transform_indices = @transform_0, window_bounds = array<i64: 16, 784>}, {pipeline_mode = #tpu.pipeline_mode<synchronous>, transform_indices = @transform_1, window_bounds = array<i64: 784, 32>}, {pipeline_mode = #tpu.pipeline_mode<synchronous>, transform_indices = @transform_2, window_bounds = array<i64: 1, 32>}, {pipeline_mode = #tpu.pipeline_mode<synchronous>, transform_indices = @transform_3, window_bounds = array<i64: 32, 128>}, {pipeline_mode = #tpu.pipeline_mode<synchronous>, transform_indices = @transform_4, window_bounds = array<i64: 1, 128>}, {transform_indices = @transform_5, window_bounds = array<i64: 16, 128>}]} {
    %c0 = arith.constant 0 : index
    %c0_0 = arith.constant 0 : index
    %0 = vector.load %arg1[%c0, %c0_0] : memref<16x784xf32, #tpu.memory_space<vmem>>, vector<16x784xf32>
    %1 = arith.truncf %0 : vector<16x784xf32> to vector<16x784xbf16>
    %c0_1 = arith.constant 0 : index
    %c0_2 = arith.constant 0 : index
    %2 = vector.load %arg2[%c0_1, %c0_2] : memref<784x32xbf16, #tpu.memory_space<vmem>>, vector<784x32xbf16>
    %cst = arith.constant dense<0.000000e+00> : vector<16x32xf32>
    %3 = tpu.matmul %1, %2, %cst {dimension_numbers = #tpu.dot_dimension_numbers<[1], [0], [0], [1], [0, 0, 1, 1], [], []>} : vector<16x784xbf16>, vector<784x32xbf16>, vector<16x32xf32> -> vector<16x32xf32>
    %c0_3 = arith.constant 0 : index
    %c0_4 = arith.constant 0 : index
    %4 = vector.load %arg3[%c0_3, %c0_4] : memref<1x32xf32, #tpu.memory_space<vmem>>, vector<1x32xf32>
    %5 = vector.broadcast %4 : vector<1x32xf32> to vector<16x32xf32>
    %6 = arith.addf %3, %5 : vector<16x32xf32>
    %7 = arith.negf %6 : vector<16x32xf32>
    %8 = math.exp %7 : vector<16x32xf32>
    %cst_5 = arith.constant 1.000000e+00 : f32
    %9 = vector.broadcast %cst_5 : f32 to vector<16x32xf32>
    %10 = arith.addf %9, %8 : vector<16x32xf32>
    %11 = arith.divf %9, %10 : vector<16x32xf32>
    %12 = arith.truncf %11 : vector<16x32xf32> to vector<16x32xbf16>
    %c0_6 = arith.constant 0 : index
    %c0_7 = arith.constant 0 : index
    %13 = vector.load %arg4[%c0_6, %c0_7] : memref<32x128xbf16, #tpu.memory_space<vmem>>, vector<32x128xbf16>
    %cst_8 = arith.constant dense<0.000000e+00> : vector<16x128xf32>
    %14 = tpu.matmul %12, %13, %cst_8 {dimension_numbers = #tpu.dot_dimension_numbers<[1], [0], [0], [1], [0, 0, 1, 1], [], []>} : vector<16x32xbf16>, vector<32x128xbf16>, vector<16x128xf32> -> vector<16x128xf32>
    %c0_9 = arith.constant 0 : index
    %c0_10 = arith.constant 0 : index
    %15 = vector.load %arg5[%c0_9, %c0_10] : memref<1x128xf32, #tpu.memory_space<vmem>>, vector<1x128xf32>
    %16 = vector.broadcast %15 : vector<1x128xf32> to vector<16x128xf32>
    %17 = arith.addf %14, %16 : vector<16x128xf32>
    %18 = arith.truncf %17 : vector<16x128xf32> to vector<16x128xbf16>
    %c0_11 = arith.constant 0 : index
    %c0_12 = arith.constant 0 : index
    %19 = vector.load %arg6[%c0_11, %c0_12] : memref<16x128xbf16, #tpu.memory_space<vmem>>, vector<16x128xbf16>
    tpu.vector_store %arg6[%c0_11, %c0_12], %18 {strides = array<i32>} : memref<16x128xbf16, #tpu.memory_space<vmem>>, vector<16x128xbf16>,
    return
  }
  func.func @transform_0(%arg0: i32) -> (i32, i32) {
    %c0_i32 = arith.constant 0 : i32
    %c0_i32_0 = arith.constant 0 : i32
    return %arg0, %c0_i32 : i32, i32
  }
  func.func @transform_1(%arg0: i32) -> (i32, i32) {
    %c0_i32 = arith.constant 0 : i32
    %c0_i32_0 = arith.constant 0 : i32
    %c0_i32_1 = arith.constant 0 : i32
    return %c0_i32, %c0_i32_0 : i32, i32
  }
  func.func @transform_2(%arg0: i32) -> (i32, i32) {
    %c0_i32 = arith.constant 0 : i32
    %c0_i32_0 = arith.constant 0 : i32
    %c0_i32_1 = arith.constant 0 : i32
    return %c0_i32, %c0_i32_0 : i32, i32
  }
  func.func @transform_3(%arg0: i32) -> (i32, i32) {
    %c0_i32 = arith.constant 0 : i32
    %c0_i32_0 = arith.constant 0 : i32
    %c0_i32_1 = arith.constant 0 : i32
    return %c0_i32, %c0_i32_0 : i32, i32
  }
  func.func @transform_4(%arg0: i32) -> (i32, i32) {
    %c0_i32 = arith.constant 0 : i32
    %c0_i32_0 = arith.constant 0 : i32
    %c0_i32_1 = arith.constant 0 : i32
    return %c0_i32, %c0_i32_0 : i32, i32
  }
  func.func @transform_5(%arg0: i32) -> (i32, i32) {
    %c0_i32 = arith.constant 0 : i32
    %c0_i32_0 = arith.constant 0 : i32
    return %arg0, %c0_i32 : i32, i32
  }
}

</mosaic_0001>

<llo_original>
// kernel: tpu_custom_call.1
$region0: #{tpu_custom_call.1}
  #allocation0 [shape = 'u32[]', space=smem, size = 0x4, offset = 0x4, fixed_abs, tag = 'smem constant byte address 0x4 - core index']
  #allocation1 [shape = 'u32[144,128]{1,0:T(1,128)}', space=vmem, size = 0x12000, scoped, tag = 'internal scratch']
  %s0 = inlined_call_operand.vmem [shape: f32[16,784], index: 0, kind: input, shape index: {}]
  %s1 = inlined_call_operand.vmem [shape: bf16[784,32], index: 1, kind: input, shape index: {}]
  %s2 = inlined_call_operand.vmem [shape: f32[1,32], index: 2, kind: input, shape index: {}]
  %s3 = inlined_call_operand.vmem [shape: bf16[32,128], index: 3, kind: input, shape index: {}]
  %s4 = inlined_call_operand.vmem [shape: f32[1,128], index: 4, kind: input, shape index: {}]
  %s5 = inlined_call_operand.hbm [shape: bf16[16,128], index: 5, kind: output, shape index: {}]
  %s6 = sld [smem:[#allocation0]]
  $region30: #{tpu_custom_call.1} parent=0
    _
  %s8 = ssub.s32 1, %s6
  %s9 = scalar_select 0, %s8, %s6
  $region1: #{tpu_custom_call.1} parent=0
    #allocation2 [shape = 'u8[4096]{0}', space=vmem, size = 0x1000, scoped, tag = 'output window, operand 0, single buffered']
    #allocation3 [shape = 's32[1]{0}', space=sflag, size = 0x4, scoped, tag = 'scoped memory for tpu_custom_call.1']
    %10 = vsyncpa [#allocation3], 0
    // Predicated region
    $region2: #{tpu_custom_call.1} parent=1 // pred_check
      _
    $region3: #{tpu_custom_call.1} parent=1 // pred_check_branch
      %12 = sbr.rel (0) target = $region5
    $region4: #{tpu_custom_call.1} parent=1 // pred_region
      _
    $region5: #{tpu_custom_call.1} parent=1 // pred_fallthru
      _
    // Predicated region
    $region6: #{tpu_custom_call.1} parent=1 // pred_check
      _
    $region7: #{tpu_custom_call.1} parent=1 // pred_check_branch
      %14 = sbr.rel (0) target = $region9
    $region8: #{tpu_custom_call.1} parent=1 // pred_region
      _
    $region9: #{tpu_custom_call.1} parent=1 // pred_fallthru
      _
    // Predicated region
    $region10: #{tpu_custom_call.1} parent=1 // pred_check
      _
    $region11: #{tpu_custom_call.1} parent=1 // pred_check_branch
      %16 = sbr.rel (0) target = $region13
    $region12: #{tpu_custom_call.1} parent=1 // pred_region
      _
    $region13: #{tpu_custom_call.1} parent=1 // pred_fallthru
      _
    // Predicated region
    $region14: #{tpu_custom_call.1} parent=1 // pred_check
      _
    $region15: #{tpu_custom_call.1} parent=1 // pred_check_branch
      %18 = sbr.rel (0) target = $region17
    $region16: #{tpu_custom_call.1} parent=1 // pred_region
      _
    $region17: #{tpu_custom_call.1} parent=1 // pred_fallthru
      _
    // Predicated region
    $region18: #{tpu_custom_call.1} parent=1 // pred_check
      _
    $region19: #{tpu_custom_call.1} parent=1 // pred_check_branch
      %20 = sbr.rel (0) target = $region21
    $region20: #{tpu_custom_call.1} parent=1 // pred_region
      _
    $region21: #{tpu_custom_call.1} parent=1 // pred_fallthru
      _
    %v22 = vld [vmem:[%s0] sm:$0xff]
    %v23 = vld [vmem:[%s0 + $0x8] sm:$0xff]
    %v24 = vld [vmem:[%s0 + $0x10] sm:$0xff]
    %v25 = vld [vmem:[%s0 + $0x18] sm:$0xff]
    %v26 = vld [vmem:[%s0 + $0x20] sm:$0xff]
    %v27 = vld [vmem:[%s0 + $0x28] sm:$0xff]
    %v28 = vld [vmem:[%s0 + $0x30] sm:$0xff]
    %v29 = vld [vmem:[%s0 + $0x38] sm:$0xff]
    %v30 = vld [vmem:[%s0 + $0x40] sm:$0xff]
    %v31 = vld [vmem:[%s0 + $0x48] sm:$0xff]
    %v32 = vld [vmem:[%s0 + $0x50] sm:$0xff]
    %v33 = vld [vmem:[%s0 + $0x58] sm:$0xff]
    %v34 = vld [vmem:[%s0 + $0x60] sm:$0xff]
    %v35 = vld [vmem:[%s0 + $0x68] sm:$0xff]
    %v36 = vpack.c.bf16 %v29, %v22
    %v37 = vpack.c.bf16 %v30, %v23
    %v38 = vpack.c.bf16 %v31, %v24
    %v39 = vpack.c.bf16 %v32, %v25
    %v40 = vpack.c.bf16 %v33, %v26
    %v41 = vpack.c.bf16 %v34, %v27
    %v42 = vpack.c.bf16 %v35, %v28
    %v43 = vld [vmem:[%s1] sm:$0xf]
    %v44 = vld [vmem:[%s1 + $0x4] sm:$0xf]
    %v45 = vld [vmem:[%s1 + $0x8] sm:$0xf]
    %v46 = vld [vmem:[%s1 + $0xc] sm:$0xf]
    %v47 = vld [vmem:[%s1 + $0x10] sm:$0xf]
    %v48 = vld [vmem:[%s1 + $0x14] sm:$0xf]
    %v49 = vld [vmem:[%s1 + $0x18] sm:$0xf]
    %v50 = vld [vmem:[%s1 + $0x1c] sm:$0xf]
    %v51 = vld [vmem:[%s1 + $0x20] sm:$0xf]
    %v52 = vld [vmem:[%s1 + $0x24] sm:$0xf]
    %v53 = vld [vmem:[%s1 + $0x28] sm:$0xf]
    %v54 = vld [vmem:[%s1 + $0x2c] sm:$0xf]
    %v55 = vld [vmem:[%s1 + $0x30] sm:$0xf]
    %v56 = vld [vmem:[%s1 + $0x34] sm:$0xf]
    %v57 = vld [vmem:[%s1 + $0x38] sm:$0xf]
    %v58 = vld [vmem:[%s1 + $0x3c] sm:$0xf]
    %v59 = vld [vmem:[%s1 + $0x40] sm:$0xf]
    %v60 = vld [vmem:[%s1 + $0x44] sm:$0xf]
    %v61 = vld [vmem:[%s1 + $0x48] sm:$0xf]
    %v62 = vld [vmem:[%s1 + $0x4c] sm:$0xf]
    %v63 = vld [vmem:[%s1 + $0x50] sm:$0xf]
    %v64 = vld [vmem:[%s1 + $0x54] sm:$0xf]
    %v65 = vld [vmem:[%s1 + $0x58] sm:$0xf]
    %v66 = vld [vmem:[%s1 + $0x5c] sm:$0xf]
    %v67 = vld [vmem:[%s1 + $0x60] sm:$0xf]
    %v68 = vld [vmem:[%s1 + $0x64] sm:$0xf]
    %v69 = vld [vmem:[%s1 + $0x68] sm:$0xf]
    %v70 = vld [vmem:[%s1 + $0x6c] sm:$0xf]
    %v71 = vld [vmem:[%s1 + $0x70] sm:$0xf]
    %v72 = vld [vmem:[%s1 + $0x74] sm:$0xf]
    %v73 = vld [vmem:[%s1 + $0x78] sm:$0xf]
    %v74 = vld [vmem:[%s1 + $0x7c] sm:$0xf]
    %v75 = vld [vmem:[%s1 + $0x80] sm:$0xf]
    %v76 = vld [vmem:[%s1 + $0x84] sm:$0xf]
    %v77 = vld [vmem:[%s1 + $0x88] sm:$0xf]
    %v78 = vld [vmem:[%s1 + $0x8c] sm:$0xf]
    %v79 = vld [vmem:[%s1 + $0x90] sm:$0xf]
    %v80 = vld [vmem:[%s1 + $0x94] sm:$0xf]
    %v81 = vld [vmem:[%s1 + $0x98] sm:$0xf]
    %v82 = vld [vmem:[%s1 + $0x9c] sm:$0xf]
    %v83 = vld [vmem:[%s1 + $0xa0] sm:$0xf]
    %v84 = vld [vmem:[%s1 + $0xa4] sm:$0xf]
    %v85 = vld [vmem:[%s1 + $0xa8] sm:$0xf]
    %v86 = vld [vmem:[%s1 + $0xac] sm:$0xf]
    %v87 = vld [vmem:[%s1 + $0xb0] sm:$0xf]
    %v88 = vld [vmem:[%s1 + $0xb4] sm:$0xf]
    %v89 = vld [vmem:[%s1 + $0xb8] sm:$0xf]
    %v90 = vld [vmem:[%s1 + $0xbc] sm:$0xf]
    %v91 = vld [vmem:[%s1 + $0xc0] sm:$0xf]
    %v92 = vld [vmem:[%s1 + $0xc4] sm:$0xf]
    %v93 = vld [vmem:[%s1 + $0xc8] sm:$0xf]
    %v94 = vld [vmem:[%s1 + $0xcc] sm:$0xf]
    %v95 = vld [vmem:[%s1 + $0xd0] sm:$0xf]
    %v96 = vld [vmem:[%s1 + $0xd4] sm:$0xf]
    %v97 = vld [vmem:[%s1 + $0xd8] sm:$0xf]
    %v98 = vld [vmem:[%s1 + $0xdc] sm:$0xf]
    %v99 = vld [vmem:[%s1 + $0xe0] sm:$0xf]
    %v100 = vld [vmem:[%s1 + $0xe4] sm:$0xf]
    %v101 = vld [vmem:[%s1 + $0xe8] sm:$0xf]
    %v102 = vld [vmem:[%s1 + $0xec] sm:$0xf]
    %v103 = vld [vmem:[%s1 + $0xf0] sm:$0xf]
    %v104 = vld [vmem:[%s1 + $0xf4] sm:$0xf]
    %v105 = vld [vmem:[%s1 + $0xf8] sm:$0xf]
    %v106 = vld [vmem:[%s1 + $0xfc] sm:$0xf]
    %v107 = vld [vmem:[%s1 + $0x100] sm:$0xf]
    %v108 = vld [vmem:[%s1 + $0x104] sm:$0xf]
    %v109 = vld [vmem:[%s1 + $0x108] sm:$0xf]
    %v110 = vld [vmem:[%s1 + $0x10c] sm:$0xf]
    %v111 = vld [vmem:[%s1 + $0x110] sm:$0xf]
    %v112 = vld [vmem:[%s1 + $0x114] sm:$0xf]
    %v113 = vld [vmem:[%s1 + $0x118] sm:$0xf]
    %v114 = vld [vmem:[%s1 + $0x11c] sm:$0xf]
    %v115 = vld [vmem:[%s1 + $0x120] sm:$0xf]
    %v116 = vld [vmem:[%s1 + $0x124] sm:$0xf]
    %v117 = vld [vmem:[%s1 + $0x128] sm:$0xf]
    %v118 = vld [vmem:[%s1 + $0x12c] sm:$0xf]
    %v119 = vld [vmem:[%s1 + $0x130] sm:$0xf]
    %v120 = vld [vmem:[%s1 + $0x134] sm:$0xf]
    %v121 = vld [vmem:[%s1 + $0x138] sm:$0xf]
    %v122 = vld [vmem:[%s1 + $0x13c] sm:$0xf]
    %v123 = vld [vmem:[%s1 + $0x140] sm:$0xf]
    %v124 = vld [vmem:[%s1 + $0x144] sm:$0xf]
    %v125 = vld [vmem:[%s1 + $0x148] sm:$0xf]
    %v126 = vld [vmem:[%s1 + $0x14c] sm:$0xf]
    %v127 = vld [vmem:[%s1 + $0x150] sm:$0xf]
    %v128 = vld [vmem:[%s1 + $0x154] sm:$0xf]
    %v129 = vld [vmem:[%s1 + $0x158] sm:$0xf]
    %v130 = vld [vmem:[%s1 + $0x15c] sm:$0xf]
    %v131 = vld [vmem:[%s1 + $0x160] sm:$0xf]
    %v132 = vld [vmem:[%s1 + $0x164] sm:$0xf]
    %v133 = vld [vmem:[%s1 + $0x168] sm:$0xf]
    %v134 = vld [vmem:[%s1 + $0x16c] sm:$0xf]
    %v135 = vld [vmem:[%s1 + $0x170] sm:$0xf]
    %v136 = vld [vmem:[%s1 + $0x174] sm:$0xf]
    %v137 = vld [vmem:[%s1 + $0x178] sm:$0xf]
    %v138 = vld [vmem:[%s1 + $0x17c] sm:$0xf]
    %v139 = vld [vmem:[%s1 + $0x180] sm:$0xf]
    %v140 = vld [vmem:[%s1 + $0x184] sm:$0xf]
    %v141 = vld [vmem:[%s2] sm:$0x1]
    %v143 = vlaneseq
    %v144 = vshrl.u32 %v143, 7
    %v145 = vsub.s32 0, %v144
    %v146 = vrot.slane %v141, %v145
    %v246 = vunpack.c.l.b16 %v43
    %v247 = vunpack.c.l.b16 %v44
    %v248 = vunpack.c.l.b16 %v45
    %v249 = vunpack.c.l.b16 %v46
    %v250 = vunpack.c.l.b16 %v47
    %v251 = vunpack.c.l.b16 %v48
    %v252 = vunpack.c.l.b16 %v49
    %v253 = vunpack.c.l.b16 %v50
    %v254 = vunpack.c.l.b16 %v51
    %v255 = vunpack.c.l.b16 %v52
    %v256 = vunpack.c.l.b16 %v53
    %v257 = vunpack.c.l.b16 %v54
    %v258 = vunpack.c.l.b16 %v55
    %v259 = vunpack.c.l.b16 %v56
    %v260 = vunpack.c.l.b16 %v57
    %v261 = vunpack.c.l.b16 %v58
    %v262 = vunpack.c.l.b16 %v59
    %v263 = vunpack.c.l.b16 %v60
    %v264 = vunpack.c.l.b16 %v61
    %v265 = vunpack.c.l.b16 %v62
    %v266 = vunpack.c.l.b16 %v63
    %v267 = vunpack.c.l.b16 %v64
    %v268 = vunpack.c.l.b16 %v65
    %v269 = vunpack.c.l.b16 %v66
    %v270 = vunpack.c.l.b16 %v67
    %v271 = vunpack.c.l.b16 %v68
    %v272 = vunpack.c.l.b16 %v69
    %v273 = vunpack.c.l.b16 %v70
    %v274 = vunpack.c.l.b16 %v71
    %v275 = vunpack.c.l.b16 %v72
    %v276 = vunpack.c.l.b16 %v73
    %v277 = vunpack.c.l.b16 %v74
    %v278 = vunpack.c.l.b16 %v75
    %v279 = vunpack.c.l.b16 %v76
    %v280 = vunpack.c.l.b16 %v77
    %v281 = vunpack.c.l.b16 %v78
    %v282 = vunpack.c.l.b16 %v79
    %v283 = vunpack.c.l.b16 %v80
    %v284 = vunpack.c.l.b16 %v81
    %v285 = vunpack.c.l.b16 %v82
    %v286 = vunpack.c.l.b16 %v83
    %v287 = vunpack.c.l.b16 %v84
    %v288 = vunpack.c.l.b16 %v85
    %v289 = vunpack.c.l.b16 %v86
    %v290 = vunpack.c.l.b16 %v87
    %v291 = vunpack.c.l.b16 %v88
    %v292 = vunpack.c.l.b16 %v89
    %v293 = vunpack.c.l.b16 %v90
    %v294 = vunpack.c.l.b16 %v91
    %v295 = vunpack.c.l.b16 %v92
    %v296 = vunpack.c.l.b16 %v93
    %v297 = vunpack.c.l.b16 %v94
    %v298 = vunpack.c.l.b16 %v95
    %v299 = vunpack.c.l.b16 %v96
    %v300 = vunpack.c.l.b16 %v97
    %v301 = vunpack.c.l.b16 %v98
    %v302 = vunpack.c.l.b16 %v99
    %v303 = vunpack.c.l.b16 %v100
    %v304 = vunpack.c.l.b16 %v101
    %v305 = vunpack.c.l.b16 %v102
    %v306 = vunpack.c.l.b16 %v103
    %v307 = vunpack.c.l.b16 %v104
    %v308 = vunpack.c.l.b16 %v105
    %v309 = vunpack.c.l.b16 %v106
    %v310 = vunpack.c.l.b16 %v107
    %v311 = vunpack.c.l.b16 %v108
    %v312 = vunpack.c.l.b16 %v109
    %v313 = vunpack.c.l.b16 %v110
    %v314 = vunpack.c.l.b16 %v111
    %v315 = vunpack.c.l.b16 %v112
    %v316 = vunpack.c.l.b16 %v113
    %v317 = vunpack.c.l.b16 %v114
    %v318 = vunpack.c.l.b16 %v115
    %v319 = vunpack.c.l.b16 %v116
    %v320 = vunpack.c.l.b16 %v117
    %v321 = vunpack.c.l.b16 %v118
    %v322 = vunpack.c.l.b16 %v119
    %v323 = vunpack.c.l.b16 %v120
    %v324 = vunpack.c.l.b16 %v121
    %v325 = vunpack.c.l.b16 %v122
    %v326 = vunpack.c.l.b16 %v123
    %v327 = vunpack.c.l.b16 %v124
    %v328 = vunpack.c.l.b16 %v125
    %v329 = vunpack.c.l.b16 %v126
    %v330 = vunpack.c.l.b16 %v127
    %v331 = vunpack.c.l.b16 %v128
    %v332 = vunpack.c.l.b16 %v129
    %v333 = vunpack.c.l.b16 %v130
    %v334 = vunpack.c.l.b16 %v131
    %v335 = vunpack.c.l.b16 %v132
    %v336 = vunpack.c.l.b16 %v133
    %v337 = vunpack.c.l.b16 %v134
    %v338 = vunpack.c.l.b16 %v135
    %v339 = vunpack.c.l.b16 %v136
    %v340 = vunpack.c.l.b16 %v137
    %v341 = vunpack.c.l.b16 %v138
    %v342 = vunpack.c.l.b16 %v139
    %v343 = vunpack.c.l.b16 %v140
    %v344 = vpack.c.b16 %v247, %v246
    %v345 = vpack.c.b16 %v249, %v248
    %v346 = vpack.c.b16 %v251, %v250
    %v347 = vpack.c.b16 %v253, %v252
    %v348 = vpack.c.b16 %v255, %v254
    %v349 = vpack.c.b16 %v257, %v256
    %v350 = vpack.c.b16 %v259, %v258
    %v351 = vpack.c.b16 %v261, %v260
    %v352 = vpack.c.b16 %v263, %v262
    %v353 = vpack.c.b16 %v265, %v264
    %v354 = vpack.c.b16 %v267, %v266
    %v355 = vpack.c.b16 %v269, %v268
    %v356 = vpack.c.b16 %v271, %v270
    %v357 = vpack.c.b16 %v273, %v272
    %v358 = vpack.c.b16 %v275, %v274
    %v359 = vpack.c.b16 %v277, %v276
    %v360 = vpack.c.b16 %v279, %v278
    %v361 = vpack.c.b16 %v281, %v280
    %v362 = vpack.c.b16 %v283, %v282
    %v363 = vpack.c.b16 %v285, %v284
    %v364 = vpack.c.b16 %v287, %v286
    %v365 = vpack.c.b16 %v289, %v288
    %v366 = vpack.c.b16 %v291, %v290
    %v367 = vpack.c.b16 %v293, %v292
    %v368 = vpack.c.b16 %v295, %v294
    %v369 = vpack.c.b16 %v297, %v296
    %v370 = vpack.c.b16 %v299, %v298
    %v371 = vpack.c.b16 %v301, %v300
    %v372 = vpack.c.b16 %v303, %v302
    %v373 = vpack.c.b16 %v305, %v304
    %v374 = vpack.c.b16 %v307, %v306
    %v375 = vpack.c.b16 %v309, %v308
    %v376 = vpack.c.b16 %v311, %v310
    %v377 = vpack.c.b16 %v313, %v312
    %v378 = vpack.c.b16 %v315, %v314
    %v379 = vpack.c.b16 %v317, %v316
    %v380 = vpack.c.b16 %v319, %v318
    %v381 = vpack.c.b16 %v321, %v320
    %v382 = vpack.c.b16 %v323, %v322
    %v383 = vpack.c.b16 %v325, %v324
    %v384 = vpack.c.b16 %v327, %v326
    %v385 = vpack.c.b16 %v329, %v328
    %v386 = vpack.c.b16 %v331, %v330
    %v387 = vpack.c.b16 %v333, %v332
    %v388 = vpack.c.b16 %v335, %v334
    %v389 = vpack.c.b16 %v337, %v336
    %v390 = vpack.c.b16 %v339, %v338
    %v391 = vpack.c.b16 %v341, %v340
    %v392 = vpack.c.b16 %v343, %v342
    %vm442 = vcmask 130048
    %v444 = vsel %vm442, %v42, 0
    %446 = vmatprep.subr.bf16.mxu0 0
    %447 = vmatpush1.bf16.msra.mxu0 %v344
    %448 = vmatprep.subr.bf16.mxu0 0
    %449 = vmatpush1.bf16.msra.mxu0 %v345
    %450 = vmatprep.subr.bf16.mxu0 0
    %451 = vmatpush1.bf16.msra.mxu0 %v346
    %452 = vmatprep.subr.bf16.mxu0 0
    %453 = vmatpush1.bf16.msra.mxu0 %v347
    %454 = vmatprep.subr.bf16.mxu0 0
    %455 = vmatpush1.bf16.msra.mxu0 %v348
    %456 = vmatprep.subr.bf16.mxu0 0
    %457 = vmatpush1.bf16.msra.mxu0 %v349
    %458 = vmatprep.subr.bf16.mxu0 0
    %459 = vmatpush1.bf16.msra.mxu0 %v350
    %460 = vmatprep.subr.bf16.mxu0 0
    %461 = vmatpush1.bf16.msra.mxu0 %v351
    %462 = vmatprep.subr.bf16.mxu0 0
    %463 = vmatpush1.bf16.msra.mxu0 %v352
    %464 = vmatprep.subr.bf16.mxu0 0
    %465 = vmatpush1.bf16.msra.mxu0 %v353
    %466 = vmatprep.subr.bf16.mxu0 0
    %467 = vmatpush1.bf16.msra.mxu0 %v354
    %468 = vmatprep.subr.bf16.mxu0 0
    %469 = vmatpush1.bf16.msra.mxu0 %v355
    %470 = vmatprep.subr.bf16.mxu0 0
    %471 = vmatpush1.bf16.msra.mxu0 %v356
    %472 = vmatprep.subr.bf16.mxu0 0
    %473 = vmatpush1.bf16.msra.mxu0 %v357
    %474 = vmatprep.subr.bf16.mxu0 0
    %475 = vmatpush1.bf16.msra.mxu0 %v358
    %476 = vmatprep.subr.bf16.mxu0 0
    %477 = vmatpush1.bf16.msra.mxu0 %v359
    %478 = vmatprep.mubr.bf16.mxu0 %v37
    %479 = vmatmul.mubr.bf16.gmra.mrb[0].mxu0 %v36
    %v480 = vpop.f32.mrb[0].mxu0
    %v481 = vadd.f32 %v146, %v480
    %v482 = vpop.f32.mrb[0].mxu0
    %v483 = vpop.f32.mrb[0].mxu0
    %v484 = vadd.f32 %v146, %v483
    %v485 = vpop.f32.mrb[0].mxu0
    %486 = vdwg.mxu0
    %487 = vmatprep.subr.bf16.mxu0 0
    %488 = vmatpush1.bf16.msra.mxu0 %v360
    %489 = vmatprep.subr.bf16.mxu0 0
    %490 = vmatpush1.bf16.msra.mxu0 %v361
    %491 = vmatprep.subr.bf16.mxu0 0
    %492 = vmatpush1.bf16.msra.mxu0 %v362
    %493 = vmatprep.subr.bf16.mxu0 0
    %494 = vmatpush1.bf16.msra.mxu0 %v363
    %495 = vmatprep.subr.bf16.mxu0 0
    %496 = vmatpush1.bf16.msra.mxu0 %v364
    %497 = vmatprep.subr.bf16.mxu0 0
    %498 = vmatpush1.bf16.msra.mxu0 %v365
    %499 = vmatprep.subr.bf16.mxu0 0
    %500 = vmatpush1.bf16.msra.mxu0 %v366
    %501 = vmatprep.subr.bf16.mxu0 0
    %502 = vmatpush1.bf16.msra.mxu0 %v367
    %503 = vmatprep.subr.bf16.mxu0 0
    %504 = vmatpush1.bf16.msra.mxu0 %v368
    %505 = vmatprep.subr.bf16.mxu0 0
    %506 = vmatpush1.bf16.msra.mxu0 %v369
    %507 = vmatprep.subr.bf16.mxu0 0
    %508 = vmatpush1.bf16.msra.mxu0 %v370
    %509 = vmatprep.subr.bf16.mxu0 0
    %510 = vmatpush1.bf16.msra.mxu0 %v371
    %511 = vmatprep.subr.bf16.mxu0 0
    %512 = vmatpush1.bf16.msra.mxu0 %v372
    %513 = vmatprep.subr.bf16.mxu0 0
    %514 = vmatpush1.bf16.msra.mxu0 %v373
    %515 = vmatprep.subr.bf16.mxu0 0
    %516 = vmatpush1.bf16.msra.mxu0 %v374
    %517 = vmatprep.subr.bf16.mxu0 0
    %518 = vmatpush1.bf16.msra.mxu0 %v375
    %519 = vmatprep.mubr.bf16.mxu0 %v39
    %520 = vmatmul.mubr.bf16.gmra.mrb[0].mxu0 %v38
    %v521 = vpop.f32.mrb[0].mxu0
    %v522 = vadd.f32 %v481, %v521
    %v523 = vpop.f32.mrb[0].mxu0
    %v524 = vpop.f32.mrb[0].mxu0
    %v525 = vadd.f32 %v484, %v524
    %v526 = vpop.f32.mrb[0].mxu0
    %527 = vdwg.mxu0
    %528 = vmatprep.subr.bf16.mxu0 0
    %529 = vmatpush1.bf16.msra.mxu0 %v376
    %530 = vmatprep.subr.bf16.mxu0 0
    %531 = vmatpush1.bf16.msra.mxu0 %v377
    %532 = vmatprep.subr.bf16.mxu0 0
    %533 = vmatpush1.bf16.msra.mxu0 %v378
    %534 = vmatprep.subr.bf16.mxu0 0
    %535 = vmatpush1.bf16.msra.mxu0 %v379
    %536 = vmatprep.subr.bf16.mxu0 0
    %537 = vmatpush1.bf16.msra.mxu0 %v380
    %538 = vmatprep.subr.bf16.mxu0 0
    %539 = vmatpush1.bf16.msra.mxu0 %v381
    %540 = vmatprep.subr.bf16.mxu0 0
    %541 = vmatpush1.bf16.msra.mxu0 %v382
    %542 = vmatprep.subr.bf16.mxu0 0
    %543 = vmatpush1.bf16.msra.mxu0 %v383
    %544 = vmatprep.subr.bf16.mxu0 0
    %545 = vmatpush1.bf16.msra.mxu0 %v384
    %546 = vmatprep.subr.bf16.mxu0 0
    %547 = vmatpush1.bf16.msra.mxu0 %v385
    %548 = vmatprep.subr.bf16.mxu0 0
    %549 = vmatpush1.bf16.msra.mxu0 %v386
    %550 = vmatprep.subr.bf16.mxu0 0
    %551 = vmatpush1.bf16.msra.mxu0 %v387
    %552 = vmatprep.subr.bf16.mxu0 0
    %553 = vmatpush1.bf16.msra.mxu0 %v388
    %554 = vmatprep.subr.bf16.mxu0 0
    %555 = vmatpush1.bf16.msra.mxu0 %v389
    %556 = vmatprep.subr.bf16.mxu0 0
    %557 = vmatpush1.bf16.msra.mxu0 %v390
    %558 = vmatprep.subr.bf16.mxu0 0
    %559 = vmatpush1.bf16.msra.mxu0 %v391
    %560 = vmatprep.mubr.bf16.mxu0 %v41
    %561 = vmatmul.mubr.bf16.gmra.mrb[0].mxu0 %v40
    %v562 = vpop.f32.mrb[0].mxu0
    %v563 = vadd.f32 %v522, %v562
    %v564 = vpop.f32.mrb[0].mxu0
    %v565 = vpop.f32.mrb[0].mxu0
    %v566 = vadd.f32 %v525, %v565
    %v567 = vpop.f32.mrb[0].mxu0
    %568 = vdwg.mxu0
    %569 = vmatprep.subr.bf16.mxu0 0
    %570 = vmatpush1.bf16.msra.mxu0 %v392
    %571 = vmatprep.subr.bf16.mxu0 0
    %572 = vmatpush1.bf16.msra.mxu0 0
    %573 = vmatprep.subr.bf16.mxu0 0
    %574 = vmatpush1.bf16.msra.mxu0 0
    %575 = vmatprep.subr.bf16.mxu0 0
    %576 = vmatpush1.bf16.msra.mxu0 0
    %577 = vmatprep.subr.bf16.mxu0 0
    %578 = vmatpush1.bf16.msra.mxu0 0
    %579 = vmatprep.subr.bf16.mxu0 0
    %580 = vmatpush1.bf16.msra.mxu0 0
    %581 = vmatprep.subr.bf16.mxu0 0
    %582 = vmatpush1.bf16.msra.mxu0 0
    %583 = vmatprep.subr.bf16.mxu0 0
    %584 = vmatpush1.bf16.msra.mxu0 0
    %585 = vmatprep.subr.bf16.mxu0 0
    %586 = vmatpush1.bf16.msra.mxu0 0
    %587 = vmatprep.subr.bf16.mxu0 0
    %588 = vmatpush1.bf16.msra.mxu0 0
    %589 = vmatprep.subr.bf16.mxu0 0
    %590 = vmatpush1.bf16.msra.mxu0 0
    %591 = vmatprep.subr.bf16.mxu0 0
    %592 = vmatpush1.bf16.msra.mxu0 0
    %593 = vmatprep.subr.bf16.mxu0 0
    %594 = vmatpush1.bf16.msra.mxu0 0
    %595 = vmatprep.subr.bf16.mxu0 0
    %596 = vmatpush1.bf16.msra.mxu0 0
    %597 = vmatprep.subr.bf16.mxu0 0
    %598 = vmatpush1.bf16.msra.mxu0 0
    %599 = vmatprep.subr.bf16.mxu0 0
    %600 = vmatpush1.bf16.msra.mxu0 0
    %601 = vmatprep.mubr.bf16.mxu0 0
    %602 = vmatmul.mubr.bf16.gmra.mrb[0].mxu0 %v444
    %v603 = vpop.f32.mrb[0].mxu0
    %v604 = vadd.f32 %v563, %v603
    %v605 = vpop.f32.mrb[0].mxu0
    %v606 = vpop.f32.mrb[0].mxu0
    %v607 = vadd.f32 %v566, %v606
    %v608 = vpop.f32.mrb[0].mxu0
    %609 = vdwg.mxu0
    %v610 = vxor.u32 %v604, 2147483648
    %v611 = vxor.u32 %v607, 2147483648
    %v612 = vmul.f32 %v610, 1.442695
    %v613 = vpow.pop %v612
    %v614 = vmul.f32 %v611, 1.442695
    %v615 = vpow.pop %v614
    %v616 = vadd.f32 %v613, 1.0
    %v617 = vadd.f32 %v615, 1.0
    %v618 = vrcp.pop %v616
    %v619 = vmul.f32 1.0, %v618
    %v620 = vrcp.pop %v617
    %v621 = vmul.f32 1.0, %v620
    %v622 = vpack.c.bf16 %v621, %v619
    %v623 = vld [vmem:[%s3] sm:$0xf]
    %v624 = vld [vmem:[%s3 + $0x4] sm:$0xf]
    %v625 = vld [vmem:[%s3 + $0x8] sm:$0xf]
    %v626 = vld [vmem:[%s3 + $0xc] sm:$0xf]
    %v627 = vld [vmem:[%s4] sm:$0x1]
    %v629 = vlaneseq
    %v630 = vshrl.u32 %v629, 7
    %v631 = vsub.s32 0, %v630
    %v632 = vrot.slane %v627, %v631
    %v638 = vunpack.c.l.b16 %v623
    %v639 = vunpack.c.l.b16 %v624
    %v640 = vunpack.c.l.b16 %v625
    %v641 = vunpack.c.l.b16 %v626
    %v642 = vpack.c.b16 %v639, %v638
    %v643 = vpack.c.b16 %v641, %v640
    %vm646 = vcmask 261120
    %v648 = vsel %vm646, %v622, 0
    %650 = vmatprep.subr.bf16.mxu0 0
    %651 = vmatpush1.bf16.msra.mxu0 %v642
    %652 = vmatprep.subr.bf16.mxu0 0
    %653 = vmatpush1.bf16.msra.mxu0 %v643
    %654 = vmatprep.subr.bf16.mxu0 0
    %655 = vmatpush1.bf16.msra.mxu0 0
    %656 = vmatprep.subr.bf16.mxu0 0
    %657 = vmatpush1.bf16.msra.mxu0 0
    %658 = vmatprep.subr.bf16.mxu0 0
    %659 = vmatpush1.bf16.msra.mxu0 0
    %660 = vmatprep.subr.bf16.mxu0 0
    %661 = vmatpush1.bf16.msra.mxu0 0
    %662 = vmatprep.subr.bf16.mxu0 0
    %663 = vmatpush1.bf16.msra.mxu0 0
    %664 = vmatprep.subr.bf16.mxu0 0
    %665 = vmatpush1.bf16.msra.mxu0 0
    %666 = vmatprep.subr.bf16.mxu0 0
    %667 = vmatpush1.bf16.msra.mxu0 0
    %668 = vmatprep.subr.bf16.mxu0 0
    %669 = vmatpush1.bf16.msra.mxu0 0
    %670 = vmatprep.subr.bf16.mxu0 0
    %671 = vmatpush1.bf16.msra.mxu0 0
    %672 = vmatprep.subr.bf16.mxu0 0
    %673 = vmatpush1.bf16.msra.mxu0 0
    %674 = vmatprep.subr.bf16.mxu0 0
    %675 = vmatpush1.bf16.msra.mxu0 0
    %676 = vmatprep.subr.bf16.mxu0 0
    %677 = vmatpush1.bf16.msra.mxu0 0
    %678 = vmatprep.subr.bf16.mxu0 0
    %679 = vmatpush1.bf16.msra.mxu0 0
    %680 = vmatprep.subr.bf16.mxu0 0
    %681 = vmatpush1.bf16.msra.mxu0 0
    %682 = vmatprep.mubr.bf16.mxu0 0
    %683 = vmatmul.mubr.bf16.gmra.mrb[0].mxu0 %v648
    %v684 = vpop.f32.mrb[0].mxu0
    %v685 = vadd.f32 %v632, %v684
    %v686 = vpop.f32.mrb[0].mxu0
    %v687 = vpop.f32.mrb[0].mxu0
    %v688 = vadd.f32 %v632, %v687
    %v689 = vpop.f32.mrb[0].mxu0
    %690 = vdwg.mxu0
    %v691 = vpack.c.bf16 %v688, %v685
    %v693 = vunpack.c.l.b16 %v691
    %v694 = vunpack.c.h.b16 %v691
    %v695 = vpack.c.b16 %v693, %v693
    %v696 = vpack.c.b16 %v694, %v694
    %699 = vst [vmem:[#allocation2] sm:$0xf] %v695
    %700 = vst [vmem:[#allocation2 + $0x4] sm:$0xf] %v696
    // Predicated region
    $region22: #{tpu_custom_call.1} parent=1 // pred_check
      _
    $region23: #{tpu_custom_call.1} parent=1 // pred_check_branch
      %702 = sbr.rel (0) target = $region25
    $region24: #{tpu_custom_call.1} parent=1 // pred_region
      %s704 = ssub.s32 128, 128
      %705 = vsyncadd [#allocation3], %s704
      %s706 = sshll.u32 [#allocation2], 4
      %s707 = int_to_ptr.vmem [resolvable:$true] %s706
      %712 = dma.vmem_to_hbm [thread:$0]  %s707, 128, %s5, [#allocation3], 64, 64, 4
    $region25: #{tpu_custom_call.1} parent=1 // pred_fallthru
      _
    // Predicated region
    $region26: #{tpu_custom_call.1} parent=1 // pred_check
      _
    $region27: #{tpu_custom_call.1} parent=1 // pred_check_branch
      %714 = sbr.rel (0) target = $region29
    $region28: #{tpu_custom_call.1} parent=1 // pred_region
      %715 = dma.done [#allocation3], 128
    $region29: #{tpu_custom_call.1} parent=1 // pred_fallthru
      _
    %716 = vsyncpa [#allocation3], 1

</llo_original>
